<compile_context>
chip_gen: v5e
topology: v5e:2x2
jax: 0.10.0
libtpu: 0.0.40
codegen_flags: <defaults>
</compile_context>

<pallas_src>
import jax
import jax.numpy as jnp
from jax import lax
from jax.experimental import pallas as pl
from jax.experimental.pallas import tpu as pltpu


def _cdiv(a, b):
    return -(-a // b)


def _round_up(x, m):
    return _cdiv(x, m) * m


# ---------------------------------------------------------------------------
# Kernel 1 (parallel): hoisted input projection  gi = x2d @ W_ih_ext + bias
# Tiled over rows and over the 3*H_pad (gate) dimension.
# ---------------------------------------------------------------------------
def input_proj_kernel(x_ref, w_ref, b_ref, gi_ref):
    acc = jnp.dot(x_ref[...], w_ref[...], preferred_element_type=jnp.float32)
    gi_ref[...] = (acc + b_ref[...]).astype(gi_ref.dtype)


# ---------------------------------------------------------------------------
# Kernel 2 (sequential): GRU recurrence, Tt timesteps per grid step.
# PyTorch gate order r | z | n, each gate in its own H_pad lane block.
#   gh    = h_{t-1} @ W_hh_ext                   (bias-free; biases folded)
#   r, z  = sigmoid(gi_{r,z} + gh_{r,z})         (gi already has b_ih+b_hh)
#   n     = tanh(gi_n + r * (gh_n + b_hh_n))
#   h_t   = n + z * (h_{t-1} - n)                ( == (1-z)*n + z*h )
# Grid = (batch blocks [parallel / megacore], time blocks [arbitrary]).
# ---------------------------------------------------------------------------
def gru_recurrence_kernel(gi_ref, h0_ref, whh_ref, bhh_n_ref, out_ref, h_scratch):
    t_blk = pl.program_id(1)                    # sequential time-block index

    @pl.when(t_blk == 0)
    def _():                                    # new batch block -> reload h0
        h_scratch[...] = h0_ref[...]

    Hp = h_scratch.shape[-1]
    Tt = out_ref.shape[0]
    bhh_n = bhh_n_ref[...]                      # (1, Hp), broadcast over rows
    w_dtype = whh_ref.dtype

    def step(i, h):
        gi_t = gi_ref[i].astype(jnp.float32)    # (bb, 3*Hp)
        gh = jnp.dot(h.astype(w_dtype), whh_ref[...],
                     preferred_element_type=jnp.float32)
        r = jax.nn.sigmoid(gi_t[:, 0:Hp] + gh[:, 0:Hp])
        z = jax.nn.sigmoid(gi_t[:, Hp:2 * Hp] + gh[:, Hp:2 * Hp])
        n = jnp.tanh(gi_t[:, 2 * Hp:3 * Hp] + r * (gh[:, 2 * Hp:3 * Hp] + bhh_n))
        h_new = n + z * (h - n)
        out_ref[i] = h_new.astype(out_ref.dtype)
        return h_new

    # Partial unroll keeps LLO scheduler visibility without blowing up code
    # size / vreg live ranges at large B_pad*H_pad (review #11).
    h_final = lax.fori_loop(0, Tt, step, h_scratch[...], unroll=min(8, Tt))
    h_scratch[...] = h_final                    # carry hidden to next T block


def _prepare_params(w_ih, w_hh, b_ih, b_hh, H, H_pad, mxu_dtype):
    """Per-gate lane-padded weight layout with biases folded where legal."""
    w_ih = jnp.asarray(w_ih, jnp.float32)       # (3H, I)
    w_hh = jnp.asarray(w_hh, jnp.float32)       # (3H, H)
    b_ih = jnp.asarray(b_ih, jnp.float32)       # (3H,)
    b_hh = jnp.asarray(b_hh, jnp.float32)       # (3H,)
    I = w_ih.shape[1]

    wih_ext = jnp.zeros((I, 3 * H_pad), jnp.float32)
    whh_ext = jnp.zeros((H_pad, 3 * H_pad), jnp.float32)
    bias_gi = jnp.zeros((1, 3 * H_pad), jnp.float32)
    bhh_n = jnp.zeros((1, H_pad), jnp.float32)

    for g in range(3):
        sl = slice(g * H, (g + 1) * H)
        wih_ext = wih_ext.at[:, g * H_pad:g * H_pad + H].set(w_ih[sl, :].T)
        whh_ext = whh_ext.at[:H, g * H_pad:g * H_pad + H].set(w_hh[sl, :].T)
        b = b_ih[sl] + (b_hh[sl] if g < 2 else 0.0)   # fold b_hh into r, z only
        bias_gi = bias_gi.at[0, g * H_pad:g * H_pad + H].set(b)
    bhh_n = bhh_n.at[0, :H].set(b_hh[2 * H:3 * H])
    return wih_ext.astype(mxu_dtype), whh_ext.astype(mxu_dtype), bias_gi, bhh_n


def _choose_time_block(T, B_pad, H_pad, gi_itemsize, vmem_budget, t_block_cap):
    """VMEM-budget-driven Tt (review #1/#2), balanced so T-padding -> ~0."""
    # Per-timestep resident bytes: double-buffered gi block + out block.
    per_step = 2 * B_pad * 3 * H_pad * gi_itemsize + 2 * B_pad * H_pad * 4
    # Invariant operands (double-buffered by the default pipeline) + scratch.
    fixed = (2 * H_pad * 3 * H_pad * 4      # W_hh
             + 2 * B_pad * H_pad * 4        # h0
             + 2 * H_pad * 4                # b_hh_n
             + B_pad * H_pad * 4)           # h carry scratch
    avail = max(vmem_budget - fixed, per_step)
    tt = max(1, min(avail // per_step, t_block_cap, T))
    # Balance time blocks so padded (dead) serial steps are minimized.
    tt = _cdiv(T, _cdiv(T, tt))
    return int(tt)


def _choose_row_tile(rows, I, n_tile, gi_itemsize, vmem_budget):
    """Row tile for the projection, capped at 512 and by the VMEM budget."""
    row_tile = min(rows, 512)                   # rows is a multiple of 8
    while row_tile > 8:
        need = (2 * 4 * (row_tile * I + I * n_tile)
                + 2 * gi_itemsize * row_tile * n_tile)
        if need <= vmem_budget:
            break
        row_tile = max(8, _round_up(row_tile // 2, 8))
    return row_tile


def encoder_rnn_forward(x, h0, w_ih, w_hh, b_ih, b_hh, *,
                        t_block_cap=32,
                        vmem_limit_bytes=48 * 1024 * 1024,
                        mxu_dtype=jnp.float32,
                        gi_dtype=jnp.float32):
    """x: (T, B, I), h0: (1, B, H); PyTorch GRU params w_ih (3H,I), w_hh (3H,H),
    b_ih/b_hh (3H,).  Returns (output (T,B,H), hidden (1,B,H)).

    mxu_dtype / gi_dtype can be set to jnp.bfloat16 on v6e/v7x for MXU rate and
    HBM traffic (review #7); default f32 keeps the strict 1e-4 correctness.
    """
    T, B, I = x.shape
    H = h0.shape[-1]

    H_pad = _round_up(H, 128)                   # lane-dense gates / outputs
    B_pad = _round_up(B, 8)                     # sublane alignment
    gi_itemsize = jnp.dtype(gi_dtype).itemsize
    vmem_budget = int(vmem_limit_bytes * 0.8)   # leave pipeline headroom

    Tt = _choose_time_block(T, B_pad, H_pad, gi_itemsize, vmem_budget, t_block_cap)
    nT = _cdiv(T, Tt)
    T_pad = nT * Tt                             # at most Tt-1 (usually 0) dead steps

    # Batch-block axis: shard independent batch halves across TensorCores
    # (megacore / v7x) when the batch is big enough (review #5).
    if B_pad >= 16 and B_pad % 16 == 0:
        b_blk = B_pad // 2
    else:
        b_blk = B_pad
    nB = B_pad // b_blk

    wih_ext, whh_ext, bias_gi, bhh_n = _prepare_params(
        w_ih, w_hh, b_ih, b_hh, H, H_pad, mxu_dtype)

    x_pad = jnp.zeros((T_pad, B_pad, I), jnp.float32).at[:T, :B, :].set(
        x.astype(jnp.float32)).astype(mxu_dtype)
    h0_pad = jnp.zeros((B_pad, H_pad), jnp.float32).at[:B, :H].set(
        h0[0].astype(jnp.float32))

    # ---- Kernel 1: hoisted input projection (fully parallel) ----------------
    rows = T_pad * B_pad
    N = 3 * H_pad
    n_tile = N
    if N > 1024:                                # N-tile large gate dims (review #9)
        for cand in (1024, 768, 512, 384, 256, 128):
            if N % cand == 0:
                n_tile = cand
                break
    row_tile = _choose_row_tile(rows, I, n_tile, gi_itemsize, vmem_budget)
    rows_pad = _round_up(rows, row_tile)        # pad rows; never one giant block

    x2d = x_pad.reshape(rows, I)
    if rows_pad != rows:
        x2d = jnp.zeros((rows_pad, I), x2d.dtype).at[:rows].set(x2d)

    gi2d = pl.pallas_call(
        input_proj_kernel,
        out_shape=jax.ShapeDtypeStruct((rows_pad, N), gi_dtype),
        grid_spec=pltpu.PrefetchScalarGridSpec(
            num_scalar_prefetch=0,
            grid=(rows_pad // row_tile, N // n_tile),
            in_specs=[
                pl.BlockSpec((row_tile, I), lambda r, n: (r, 0)),   # x rows
                pl.BlockSpec((I, n_tile), lambda r, n: (0, n)),     # W_ih_ext
                pl.BlockSpec((1, n_tile), lambda r, n: (0, n)),     # folded bias
            ],
            out_specs=pl.BlockSpec((row_tile, n_tile), lambda r, n: (r, n)),
        ),
        compiler_params=pltpu.CompilerParams(
            dimension_semantics=("parallel", "parallel"),
            vmem_limit_bytes=vmem_limit_bytes),
    )(x2d, wih_ext, bias_gi)
    gi = gi2d[:rows].reshape(T_pad, B_pad, N)

    # ---- Kernel 2: sequential GRU recurrence, Tt timesteps / grid step ------
    out_pad = pl.pallas_call(
        gru_recurrence_kernel,
        out_shape=jax.ShapeDtypeStruct((T_pad, B_pad, H_pad), jnp.float32),
        grid_spec=pltpu.PrefetchScalarGridSpec(
            num_scalar_prefetch=0,
            grid=(nB, nT),
            in_specs=[
                pl.BlockSpec((Tt, b_blk, N), lambda b, t: (t, b, 0)),     # gi
                pl.BlockSpec((b_blk, H_pad), lambda b, t: (b, 0)),        # h0
                pl.BlockSpec((H_pad, N), lambda b, t: (0, 0)),            # W_hh_ext
                pl.BlockSpec((1, H_pad), lambda b, t: (0, 0)),            # b_hh_n
            ],
            out_specs=pl.BlockSpec((Tt, b_blk, H_pad), lambda b, t: (t, b, 0)),
            scratch_shapes=[pltpu.VMEM((b_blk, H_pad), jnp.float32)],
        ),
        compiler_params=pltpu.CompilerParams(
            dimension_semantics=("parallel", "arbitrary"),  # batch || , time seq
            vmem_limit_bytes=vmem_limit_bytes),
    )(gi, h0_pad, whh_ext, bhh_n)

    out = out_pad[:T, :B, :H]
    hidden = out[T - 1:T]                       # hidden_n == output[T-1]
    return out, hidden


def gru_reference(x, h0, w_ih, w_hh, b_ih, b_hh):
    """Pure-JAX reference of torch.nn.GRU forward (1 layer, unidirectional),
    written gate-by-gate to match the PyTorch definition exactly:
      r = sigmoid(W_ir x + b_ir + W_hr h + b_hr)
      z = sigmoid(W_iz x + b_iz + W_hz h + b_hz)
      n = tanh(  W_in x + b_in + r * (W_hn h + b_hn))
      h' = (1 - z) * n + z * h
    """
    H = h0.shape[-1]

    def gate(w, b, v):
        return v @ w.T + b

    def step(h, x_t):
        r = jax.nn.sigmoid(gate(w_ih[0:H], b_ih[0:H], x_t)
                           + gate(w_hh[0:H], b_hh[0:H], h))
        z = jax.nn.sigmoid(gate(w_ih[H:2 * H], b_ih[H:2 * H], x_t)
                           + gate(w_hh[H:2 * H], b_hh[H:2 * H], h))
        n = jnp.tanh(gate(w_ih[2 * H:], b_ih[2 * H:], x_t)
                     + r * gate(w_hh[2 * H:], b_hh[2 * H:], h))
        h_new = (1.0 - z) * n + z * h
        return h_new, h_new

    h_last, outs = lax.scan(step, h0[0], x)
    return outs, h_last[None]


if __name__ == "__main__":
    T, B, I, H = 8, 4, 16, 32  # seq=8, batch=4, input_size=16, hidden_size=32

    key = jax.random.PRNGKey(0)
    k_x, k_h, k1, k2, k3, k4 = jax.random.split(key, 6)

    # PyTorch GRU default init: U(-1/sqrt(H), 1/sqrt(H)).
    bound = 1.0 / float(H) ** 0.5
    w_ih = jax.random.uniform(k1, (3 * H, I), jnp.float32, -bound, bound)
    w_hh = jax.random.uniform(k2, (3 * H, H), jnp.float32, -bound, bound)
    b_ih = jax.random.uniform(k3, (3 * H,), jnp.float32, -bound, bound)
    b_hh = jax.random.uniform(k4, (3 * H,), jnp.float32, -bound, bound)

    x = jax.random.normal(k_x, (T, B, I), jnp.float32)
    h0 = jax.random.normal(k_h, (1, B, H), jnp.float32)

    out, hn = encoder_rnn_forward(x, h0, w_ih, w_hh, b_ih, b_hh)
    out = jax.block_until_ready(out)
    hn = jax.block_until_ready(hn)

    out_ref, hn_ref = gru_reference(x, h0, w_ih, w_hh, b_ih, b_hh)
    assert out.shape == (T, B, H) and hn.shape == (1, B, H)
    assert jnp.allclose(out, out_ref, atol=1e-4, rtol=1e-4), \
        f"max|out-ref|={float(jnp.max(jnp.abs(out - out_ref)))}"
    assert jnp.allclose(hn, hn_ref, atol=1e-4, rtol=1e-4)

    print("KERNEL_OK")
</pallas_src>

<mosaic_0001>
module attributes {stable_mosaic.version = 11 : i64} {
  func.func @input_proj_kernel(%arg0: i32, %arg1: i32, %arg2: memref<64x16xf32, #tpu.memory_space<vmem>>, %arg3: memref<16x384xf32, #tpu.memory_space<vmem>>, %arg4: memref<1x384xf32, #tpu.memory_space<vmem>>, %arg5: memref<64x384xf32, #tpu.memory_space<vmem>>) attributes {dimension_semantics = [#tpu.dimension_semantics<parallel>, #tpu.dimension_semantics<parallel>], iteration_bounds = array<i64: 1, 1>, scalar_prefetch = 0 : i64, scratch_operands = 0 : i64, tpu.core_type = #tpu.core_type<tc>, window_params = [{transform_indices = @transform_0, window_bounds = array<i64: 64, 16>}, {transform_indices = @transform_1, window_bounds = array<i64: 16, 384>}, {transform_indices = @transform_2, window_bounds = array<i64: 1, 384>}, {transform_indices = @transform_3, window_bounds = array<i64: 64, 384>}]} {
    %c0 = arith.constant 0 : index
    %c0_0 = arith.constant 0 : index
    %0 = vector.load %arg2[%c0, %c0_0] : memref<64x16xf32, #tpu.memory_space<vmem>>, vector<64x16xf32>
    %c0_1 = arith.constant 0 : index
    %c0_2 = arith.constant 0 : index
    %1 = vector.load %arg3[%c0_1, %c0_2] : memref<16x384xf32, #tpu.memory_space<vmem>>, vector<16x384xf32>
    %cst = arith.constant dense<0.000000e+00> : vector<64x384xf32>
    %2 = tpu.matmul %0, %1, %cst {dimension_numbers = #tpu.dot_dimension_numbers<[1], [0], [0], [1], [0, 0, 1, 1], [], []>} : vector<64x16xf32>, vector<16x384xf32>, vector<64x384xf32> -> vector<64x384xf32>
    %c0_3 = arith.constant 0 : index
    %c0_4 = arith.constant 0 : index
    %3 = vector.load %arg4[%c0_3, %c0_4] : memref<1x384xf32, #tpu.memory_space<vmem>>, vector<1x384xf32>
    %4 = vector.broadcast %3 : vector<1x384xf32> to vector<64x384xf32>
    %5 = arith.addf %2, %4 : vector<64x384xf32>
    %c0_5 = arith.constant 0 : index
    %c0_6 = arith.constant 0 : index
    %6 = vector.load %arg5[%c0_5, %c0_6] : memref<64x384xf32, #tpu.memory_space<vmem>>, vector<64x384xf32>
    tpu.vector_store %arg5[%c0_5, %c0_6], %5 {strides = array<i32>} : memref<64x384xf32, #tpu.memory_space<vmem>>, vector<64x384xf32>,
    return
  }
  func.func @transform_0(%arg0: i32, %arg1: i32) -> (i32, i32) {
    %c0_i32 = arith.constant 0 : i32
    %c0_i32_0 = arith.constant 0 : i32
    return %arg0, %c0_i32 : i32, i32
  }
  func.func @transform_1(%arg0: i32, %arg1: i32) -> (i32, i32) {
    %c0_i32 = arith.constant 0 : i32
    %c0_i32_0 = arith.constant 0 : i32
    return %c0_i32, %arg1 : i32, i32
  }
  func.func @transform_2(%arg0: i32, %arg1: i32) -> (i32, i32) {
    %c0_i32 = arith.constant 0 : i32
    %c0_i32_0 = arith.constant 0 : i32
    return %c0_i32, %arg1 : i32, i32
  }
  func.func @transform_3(%arg0: i32, %arg1: i32) -> (i32, i32) {
    %c0_i32 = arith.constant 0 : i32
    return %arg0, %arg1 : i32, i32
  }
}

</mosaic_0001>

<llo_original>
// kernel: tpu_custom_call.1
$region0: #{tpu_custom_call.1}
  #allocation0 [shape = 'u32[]', space=smem, size = 0x4, offset = 0x4, fixed_abs, tag = 'smem constant byte address 0x4 - core index']
  #allocation1 [shape = 'u32[72,128]{1,0:T(1,128)}', space=vmem, size = 0x9000, scoped, tag = 'internal scratch']
  %s0 = inlined_call_operand.vmem [shape: f32[64,16], index: 0, kind: input, shape index: {}]
  %s1 = inlined_call_operand.vmem [shape: f32[16,384], index: 1, kind: input, shape index: {}]
  %s2 = inlined_call_operand.vmem [shape: f32[1,384], index: 2, kind: input, shape index: {}]
  %s3 = inlined_call_operand.hbm [shape: f32[64,384], index: 3, kind: output, shape index: {}]
  %s4 = sld [smem:[#allocation0]]
  $region22: #{tpu_custom_call.1} parent=0
    _
  %s6 = ssub.s32 1, %s4
  %s7 = scalar_select 0, %s6, %s4
  $region1: #{tpu_custom_call.1} parent=0
    #allocation2 [shape = 'u8[98304]{0}', space=vmem, size = 0x18000, scoped, tag = 'output window, operand 0, single buffered']
    #allocation3 [shape = 's32[1]{0}', space=sflag, size = 0x4, scoped, tag = 'scoped memory for tpu_custom_call.1']
    %8 = vsyncpa [#allocation3], 0
    // Predicated region
    $region2: #{tpu_custom_call.1} parent=1 // pred_check
      _
    $region3: #{tpu_custom_call.1} parent=1 // pred_check_branch
      %10 = sbr.rel (0) target = $region5
    $region4: #{tpu_custom_call.1} parent=1 // pred_region
      _
    $region5: #{tpu_custom_call.1} parent=1 // pred_fallthru
      _
    // Predicated region
    $region6: #{tpu_custom_call.1} parent=1 // pred_check
      _
    $region7: #{tpu_custom_call.1} parent=1 // pred_check_branch
      %12 = sbr.rel (0) target = $region9
    $region8: #{tpu_custom_call.1} parent=1 // pred_region
      _
    $region9: #{tpu_custom_call.1} parent=1 // pred_fallthru
      _
    // Predicated region
    $region10: #{tpu_custom_call.1} parent=1 // pred_check
      _
    $region11: #{tpu_custom_call.1} parent=1 // pred_check_branch
      %14 = sbr.rel (0) target = $region13
    $region12: #{tpu_custom_call.1} parent=1 // pred_region
      _
    $region13: #{tpu_custom_call.1} parent=1 // pred_fallthru
      _
    %v15 = vld [vmem:[%s0] sm:$0xff]
    %v16 = vld [vmem:[%s0 + $0x8] sm:$0xff]
    %v17 = vld [vmem:[%s0 + $0x10] sm:$0xff]
    %v18 = vld [vmem:[%s0 + $0x18] sm:$0xff]
    %v19 = vld [vmem:[%s0 + $0x20] sm:$0xff]
    %v20 = vld [vmem:[%s0 + $0x28] sm:$0xff]
    %v21 = vld [vmem:[%s0 + $0x30] sm:$0xff]
    %v22 = vld [vmem:[%s0 + $0x38] sm:$0xff]
    %v23 = vld [vmem:[%s1] sm:$0xff]
    %v24 = vld [vmem:[%s1 + $0x8] sm:$0xff]
    %v25 = vld [vmem:[%s1 + $0x10] sm:$0xff]
    %v26 = vld [vmem:[%s1 + $0x18] sm:$0xff]
    %v27 = vld [vmem:[%s1 + $0x20] sm:$0xff]
    %v28 = vld [vmem:[%s1 + $0x28] sm:$0xff]
    %v29 = vld [vmem:[%s2] sm:$0x7]
    %v31 = vperm.slane %v29, 0
    %v32 = vperm.slane %v29, 1
    %v33 = vperm.slane %v29, 2
    %vm37 = vcmask 130048
    %v39 = vsel %vm37, %v15, 0
    %v42 = vsel %vm37, %v16, 0
    %v45 = vsel %vm37, %v17, 0
    %v48 = vsel %vm37, %v18, 0
    %v51 = vsel %vm37, %v19, 0
    %v54 = vsel %vm37, %v20, 0
    %v57 = vsel %vm37, %v21, 0
    %v60 = vsel %vm37, %v22, 0
    %62 = vmatpush.msra.mxu0 0.0
    %63 = vmatpush.msra.mxu0 0.0
    %64 = vmatpush.msra.mxu0 0.0
    %65 = vmatpush.msra.mxu0 0.0
    %66 = vmatpush.msra.mxu0 0.0
    %67 = vmatpush.msra.mxu0 0.0
    %68 = vmatpush.msra.mxu0 0.0
    %69 = vmatpush.msra.mxu0 0.0
    %70 = vmatpush.msra.mxu0 0.0
    %71 = vmatpush.msra.mxu0 0.0
    %72 = vmatpush.msra.mxu0 0.0
    %73 = vmatpush.msra.mxu0 0.0
    %74 = vmatpush.msra.mxu0 0.0
    %75 = vmatpush.msra.mxu0 0.0
    %76 = vmatpush.msra.mxu0 %v26
    %77 = vmatpush.msra.mxu0 %v23
    %78 = vmatmul.f32.gmra.mxu0 %v39
    %v79 = vpop.f32.mrf.mxu0
    %v80 = vadd.f32 %v31, %v79
    %81 = vmatmul.f32.gmra.mxu0 %v42
    %v82 = vpop.f32.mrf.mxu0
    %v83 = vadd.f32 %v31, %v82
    %84 = vmatmul.f32.gmra.mxu0 %v45
    %v85 = vpop.f32.mrf.mxu0
    %v86 = vadd.f32 %v31, %v85
    %87 = vmatmul.f32.gmra.mxu0 %v48
    %v88 = vpop.f32.mrf.mxu0
    %v89 = vadd.f32 %v31, %v88
    %90 = vmatmul.f32.gmra.mxu0 %v51
    %v91 = vpop.f32.mrf.mxu0
    %v92 = vadd.f32 %v31, %v91
    %93 = vmatmul.f32.gmra.mxu0 %v54
    %v94 = vpop.f32.mrf.mxu0
    %v95 = vadd.f32 %v31, %v94
    %96 = vmatmul.f32.gmra.mxu0 %v57
    %v97 = vpop.f32.mrf.mxu0
    %v98 = vadd.f32 %v31, %v97
    %99 = vmatmul.f32.gmra.mxu0 %v60
    %v100 = vpop.f32.mrf.mxu0
    %v101 = vadd.f32 %v31, %v100
    %102 = vdwg.mxu0
    %103 = vmatpush.msra.mxu0 0.0
    %104 = vmatpush.msra.mxu0 0.0
    %105 = vmatpush.msra.mxu0 0.0
    %106 = vmatpush.msra.mxu0 0.0
    %107 = vmatpush.msra.mxu0 0.0
    %108 = vmatpush.msra.mxu0 0.0
    %109 = vmatpush.msra.mxu0 0.0
    %110 = vmatpush.msra.mxu0 0.0
    %111 = vmatpush.msra.mxu0 0.0
    %112 = vmatpush.msra.mxu0 0.0
    %113 = vmatpush.msra.mxu0 0.0
    %114 = vmatpush.msra.mxu0 0.0
    %115 = vmatpush.msra.mxu0 0.0
    %116 = vmatpush.msra.mxu0 0.0
    %117 = vmatpush.msra.mxu0 %v27
    %118 = vmatpush.msra.mxu0 %v24
    %119 = vmatmul.f32.gmra.mxu0 %v39
    %v120 = vpop.f32.mrf.mxu0
    %v121 = vadd.f32 %v32, %v120
    %122 = vmatmul.f32.gmra.mxu0 %v42
    %v123 = vpop.f32.mrf.mxu0
    %v124 = vadd.f32 %v32, %v123
    %125 = vmatmul.f32.gmra.mxu0 %v45
    %v126 = vpop.f32.mrf.mxu0
    %v127 = vadd.f32 %v32, %v126
    %128 = vmatmul.f32.gmra.mxu0 %v48
    %v129 = vpop.f32.mrf.mxu0
    %v130 = vadd.f32 %v32, %v129
    %131 = vmatmul.f32.gmra.mxu0 %v51
    %v132 = vpop.f32.mrf.mxu0
    %v133 = vadd.f32 %v32, %v132
    %134 = vmatmul.f32.gmra.mxu0 %v54
    %v135 = vpop.f32.mrf.mxu0
    %v136 = vadd.f32 %v32, %v135
    %137 = vmatmul.f32.gmra.mxu0 %v57
    %v138 = vpop.f32.mrf.mxu0
    %v139 = vadd.f32 %v32, %v138
    %140 = vmatmul.f32.gmra.mxu0 %v60
    %v141 = vpop.f32.mrf.mxu0
    %v142 = vadd.f32 %v32, %v141
    %143 = vdwg.mxu0
    %144 = vmatpush.msra.mxu0 0.0
    %145 = vmatpush.msra.mxu0 0.0
    %146 = vmatpush.msra.mxu0 0.0
    %147 = vmatpush.msra.mxu0 0.0
    %148 = vmatpush.msra.mxu0 0.0
    %149 = vmatpush.msra.mxu0 0.0
    %150 = vmatpush.msra.mxu0 0.0
    %151 = vmatpush.msra.mxu0 0.0
    %152 = vmatpush.msra.mxu0 0.0
    %153 = vmatpush.msra.mxu0 0.0
    %154 = vmatpush.msra.mxu0 0.0
    %155 = vmatpush.msra.mxu0 0.0
    %156 = vmatpush.msra.mxu0 0.0
    %157 = vmatpush.msra.mxu0 0.0
    %158 = vmatpush.msra.mxu0 %v28
    %159 = vmatpush.msra.mxu0 %v25
    %160 = vmatmul.f32.gmra.mxu0 %v39
    %v161 = vpop.f32.mrf.mxu0
    %v162 = vadd.f32 %v33, %v161
    %163 = vmatmul.f32.gmra.mxu0 %v42
    %v164 = vpop.f32.mrf.mxu0
    %v165 = vadd.f32 %v33, %v164
    %166 = vmatmul.f32.gmra.mxu0 %v45
    %v167 = vpop.f32.mrf.mxu0
    %v168 = vadd.f32 %v33, %v167
    %169 = vmatmul.f32.gmra.mxu0 %v48
    %v170 = vpop.f32.mrf.mxu0
    %v171 = vadd.f32 %v33, %v170
    %172 = vmatmul.f32.gmra.mxu0 %v51
    %v173 = vpop.f32.mrf.mxu0
    %v174 = vadd.f32 %v33, %v173
    %175 = vmatmul.f32.gmra.mxu0 %v54
    %v176 = vpop.f32.mrf.mxu0
    %v177 = vadd.f32 %v33, %v176
    %178 = vmatmul.f32.gmra.mxu0 %v57
    %v179 = vpop.f32.mrf.mxu0
    %v180 = vadd.f32 %v33, %v179
    %181 = vmatmul.f32.gmra.mxu0 %v60
    %v182 = vpop.f32.mrf.mxu0
    %v183 = vadd.f32 %v33, %v182
    %184 = vdwg.mxu0
    %185 = vst [vmem:[#allocation2] sm:$0xff] %v80
    %186 = vst [vmem:[#allocation2 + $0x8] sm:$0xff] %v121
    %187 = vst [vmem:[#allocation2 + $0x10] sm:$0xff] %v162
    %188 = vst [vmem:[#allocation2 + $0x18] sm:$0xff] %v83
    %189 = vst [vmem:[#allocation2 + $0x20] sm:$0xff] %v124
    %190 = vst [vmem:[#allocation2 + $0x28] sm:$0xff] %v165
    %191 = vst [vmem:[#allocation2 + $0x30] sm:$0xff] %v86
    %192 = vst [vmem:[#allocation2 + $0x38] sm:$0xff] %v127
    %193 = vst [vmem:[#allocation2 + $0x40] sm:$0xff] %v168
    %194 = vst [vmem:[#allocation2 + $0x48] sm:$0xff] %v89
    %195 = vst [vmem:[#allocation2 + $0x50] sm:$0xff] %v130
    %196 = vst [vmem:[#allocation2 + $0x58] sm:$0xff] %v171
    %197 = vst [vmem:[#allocation2 + $0x60] sm:$0xff] %v92
    %198 = vst [vmem:[#allocation2 + $0x68] sm:$0xff] %v133
    %199 = vst [vmem:[#allocation2 + $0x70] sm:$0xff] %v174
    %200 = vst [vmem:[#allocation2 + $0x78] sm:$0xff] %v95
    %201 = vst [vmem:[#allocation2 + $0x80] sm:$0xff] %v136
    %202 = vst [vmem:[#allocation2 + $0x88] sm:$0xff] %v177
    %203 = vst [vmem:[#allocation2 + $0x90] sm:$0xff] %v98
    %204 = vst [vmem:[#allocation2 + $0x98] sm:$0xff] %v139
    %205 = vst [vmem:[#allocation2 + $0xa0] sm:$0xff] %v180
    %206 = vst [vmem:[#allocation2 + $0xa8] sm:$0xff] %v101
    %207 = vst [vmem:[#allocation2 + $0xb0] sm:$0xff] %v142
    %208 = vst [vmem:[#allocation2 + $0xb8] sm:$0xff] %v183
    // Predicated region
    $region14: #{tpu_custom_call.1} parent=1 // pred_check
      _
    $region15: #{tpu_custom_call.1} parent=1 // pred_check_branch
      %210 = sbr.rel (0) target = $region17
    $region16: #{tpu_custom_call.1} parent=1 // pred_region
      %212 = vsyncadd [#allocation3], 0
      %s213 = sshll.u32 [#allocation2], 4
      %s214 = int_to_ptr.vmem [resolvable:$true] %s213
      %s215 = sshll.u32 %s3, 4
      %s216 = int_to_ptr.hbm [resolvable:$true] %s215
      %221 = dma.vmem_to_hbm [thread:$0]  %s214, 3072, %s216, [#allocation3], 384, 384, 24
    $region17: #{tpu_custom_call.1} parent=1 // pred_fallthru
      _
    // Predicated region
    $region18: #{tpu_custom_call.1} parent=1 // pred_check
      _
    $region19: #{tpu_custom_call.1} parent=1 // pred_check_branch
      %223 = sbr.rel (0) target = $region21
    $region20: #{tpu_custom_call.1} parent=1 // pred_region
      %225 = dma.done [#allocation3], 3072
    $region21: #{tpu_custom_call.1} parent=1 // pred_fallthru
      _
    %226 = vsyncpa [#allocation3], 1

</llo_original>
